<compile_context>
chip_gen: v7x
topology: tpu7x:2x2x1
jax: 0.10.0
libtpu: 0.0.40
codegen_flags: <defaults>
</compile_context>

<pallas_src>
import jax
import jax.numpy as jnp
from jax import lax
from jax.experimental import pallas as pl
from jax.experimental.pallas import tpu as pltpu


def _generation_budgets():
    """(tile_bytes_per_input, vmem_limit_bytes) derived from the chip's VMEM."""
    vmem_cap = None
    try:
        info = pltpu.get_tpu_info()
        vmem_cap = getattr(info, "vmem_capacity_bytes", None)
    except Exception:
        vmem_cap = None
    if vmem_cap is None:
        vmem_cap = 128 * 1024 * 1024
    if vmem_cap <= 96 * 1024 * 1024:
        # v7x-class: 64 MiB physical per TC -> leave headroom for the compiler.
        return 8 * 1024 * 1024, 44 * 1024 * 1024
    # v5e / v6e: 128 MiB physical.
    return 14 * 1024 * 1024, 100 * 1024 * 1024


def _make_rmse_kernel(H, W, TH, KP, thresh):
    """Kernel over (TH, W) row-blocks of the flattened (C*H, W) image."""

    def kernel(out_ref, tgt_ref, loss_ref, cnt_ref, loss_acc, cnt_acc):
        s = pl.program_id(1)
        k = pl.program_id(2)

        @pl.when(k == 0)
        def _init():
            loss_acc[...] = jnp.zeros_like(loss_acc)
            cnt_acc[...] = jnp.zeros_like(cnt_acc)

        t = tgt_ref[...]          # (TH, W), native dtype (bf16 fast path)
        o = out_ref[...]          # (TH, W)

        # H-crop as a cheap per-row mask: flattened row r belongs to image row
        # h = r % H; keep 14 <= h < H-14.  Only TH scalar-lane elements of
        # work, then one broadcast-AND per element.
        row0 = (s * KP + k) * TH
        r = row0 + lax.broadcasted_iota(jnp.int32, (TH, 1), 0)
        h = r % H
        row_ok = (h >= 14) & (h < H - 14)

        valid = (t > jnp.asarray(thresh, t.dtype)) & row_ok      # (TH, W)
        vf = valid.astype(jnp.float32)
        d = (t - o).astype(jnp.float32) * vf                     # ((t-o)*val)
        err = d * d

        # (TH, W) -> (8, W): pure elementwise vreg adds (TH % 8 == 0).
        loss_acc[...] += err.reshape(-1, 8, W).sum(axis=0)
        cnt_acc[...] += vf.reshape(-1, 8, W).sum(axis=0)

        @pl.when(k == KP - 1)
        def _finalize():
            # Deferred W-crop: zero columns outside [8, W-8) once, here,
            # instead of masking every element of every tile.
            wi = lax.broadcasted_iota(jnp.int32, (1, W), 1)
            wmask = ((wi >= 8) & (wi < W - 8)).astype(jnp.float32)
            loss_ref[...] = jnp.sum(loss_acc[...] * wmask).reshape(1, 1)
            cnt_ref[...] = jnp.sum(cnt_acc[...] * wmask).reshape(1, 1)

    return kernel


def rmse_pallas(outputs, target, *, tile_bytes=None, vmem_limit_bytes=None):
    """outputs: tuple/list whose first element is NCHW; target: NCHW array."""
    out = outputs[0]
    tgt = target
    assert out.shape == tgt.shape, (out.shape, tgt.shape)
    B, C, H, W = out.shape
    # TODO(synk): crop assumes H > 28 and W > 16, same implicit assumption as
    # the PyTorch module.

    if tile_bytes is None or vmem_limit_bytes is None:
        tb, vl = _generation_budgets()
        tile_bytes = tile_bytes if tile_bytes is not None else tb
        vmem_limit_bytes = vmem_limit_bytes if vmem_limit_bytes is not None else vl

    itemsize = max(jnp.dtype(out.dtype).itemsize, jnp.dtype(tgt.dtype).itemsize)
    min_item = min(jnp.dtype(out.dtype).itemsize, jnp.dtype(tgt.dtype).itemsize)
    sub = max(8, 32 // max(1, min_item))      # sublane packing: 8/16/32

    # Flatten NCHW -> (B, C*H, W): free contiguous reshape, one DMA per block.
    R = C * H
    out_f = out.reshape(B, R, W)
    tgt_f = tgt.reshape(B, R, W)

    # Largest row-tile (multiple of `sub`) within the per-input byte budget.
    rows_budget = max(sub, (tile_bytes // max(1, W * itemsize)) // sub * sub)
    r_up = (-(-R // sub)) * sub
    cap = max(sub, min(rows_budget, r_up))

    # Prefer a tile that exactly divides R (no partial/clamped last block).
    th = None
    if R % sub == 0:
        cand, iters = cap, 0
        while cand >= sub and iters < 4096:
            if R % cand == 0:
                th = cand
                break
            cand -= sub
            iters += 1
    if th is None:
        th = cap  # fall back to zero-padding the row axis below

    K = -(-R // th)  # cdiv
    # Second parallel axis for v7x's two TensorCores (only when it is free,
    # i.e. K even); v5e/v6e are single-core and unaffected.
    nsplit = 2 if (K >= 2 and K % 2 == 0) else 1
    kp = K // nsplit

    r_pad = K * th
    if r_pad != R:
        padw = ((0, 0), (0, r_pad - R), (0, 0))
        out_f = jnp.pad(out_f, padw)
        tgt_f = jnp.pad(tgt_f, padw)   # zero target rows fail (t > 0.001)

    # Make sure the scoped limit covers double-buffered inputs + scratch.
    needed = 4 * th * W * itemsize + 2 * 8 * W * 4 + (2 << 20)
    vmem_limit_bytes = max(vmem_limit_bytes, needed)

    kernel = _make_rmse_kernel(H=H, W=W, TH=th, KP=kp, thresh=0.001)

    grid_spec = pltpu.PrefetchScalarGridSpec(
        num_scalar_prefetch=0,
        grid=(B, nsplit, kp),
        in_specs=[
            pl.BlockSpec((None, th, W), lambda b, s, k: (b, s * kp + k, 0)),
            pl.BlockSpec((None, th, W), lambda b, s, k: (b, s * kp + k, 0)),
        ],
        out_specs=[
            pl.BlockSpec((None, 1, 1), lambda b, s, k: (b, s, 0)),
            pl.BlockSpec((None, 1, 1), lambda b, s, k: (b, s, 0)),
        ],
        scratch_shapes=[
            pltpu.VMEM((8, W), jnp.float32),   # loss partial sums
            pltpu.VMEM((8, W), jnp.float32),   # count partial sums
        ],
    )

    loss_p, cnt_p = pl.pallas_call(
        kernel,
        out_shape=(
            jax.ShapeDtypeStruct((B, nsplit, 1), jnp.float32),
            jax.ShapeDtypeStruct((B, nsplit, 1), jnp.float32),
        ),
        grid_spec=grid_spec,
        compiler_params=pltpu.CompilerParams(
            dimension_semantics=("parallel", "parallel", "arbitrary"),
            vmem_limit_bytes=vmem_limit_bytes,
        ),
    )(out_f, tgt_f)

    loss = jnp.sum(loss_p, axis=(1, 2))   # (B,)
    cnt = jnp.sum(cnt_p, axis=(1, 2))     # (B,)
    return jnp.sqrt(loss / cnt).reshape(B, 1, 1)


def rmse_reference(outputs, target):
    out = outputs[0][:, :, 14:-14, 8:-8].astype(jnp.float32)
    tgt = target[:, :, 14:-14, 8:-8].astype(jnp.float32)
    mask = (tgt > 0.001).astype(jnp.float32)
    err = (tgt * mask - out * mask) ** 2
    loss = jnp.sum(err.reshape(err.shape[0], 1, -1), axis=-1, keepdims=True)
    cnt = jnp.sum(mask.reshape(mask.shape[0], 1, -1), axis=-1, keepdims=True)
    return jnp.sqrt(loss / cnt)


if __name__ == "__main__":
    key = jax.random.PRNGKey(0)
    k1, k2 = jax.random.split(key)

    # Small NCHW shapes; H/W chosen so the crop [14:-14, 8:-8] leaves 16x16.
    B, C, H, W = 2, 4, 44, 32
    pred = jax.random.uniform(k1, (B, C, H, W), dtype=jnp.float32)
    tgt_raw = jax.random.uniform(k2, (B, C, H, W), dtype=jnp.float32)
    target = jnp.where(tgt_raw > 0.3, tgt_raw, 0.0)  # mix of valid / invalid

    result = jax.block_until_ready(rmse_pallas((pred,), target))
    ref = rmse_reference((pred,), target)

    assert result.shape == (B, 1, 1), result.shape
    assert jnp.allclose(result, ref, rtol=1e-5, atol=1e-6), (result, ref)

    print("KERNEL_OK")
</pallas_src>

<mosaic_0001>
module attributes {stable_mosaic.version = 11 : i64} {
  func.func @kernel(%arg0: i32, %arg1: i32, %arg2: i32, %arg3: memref<1x176x32xf32, #tpu.memory_space<vmem>>, %arg4: memref<1x176x32xf32, #tpu.memory_space<vmem>>, %arg5: memref<1x1x1xf32, #tpu.memory_space<vmem>>, %arg6: memref<1x1x1xf32, #tpu.memory_space<vmem>>, %arg7: memref<8x32xf32, #tpu.memory_space<vmem>>, %arg8: memref<8x32xf32, #tpu.memory_space<vmem>>) attributes {dimension_semantics = [#tpu.dimension_semantics<parallel>, #tpu.dimension_semantics<parallel>, #tpu.dimension_semantics<arbitrary>], iteration_bounds = array<i64: 2, 1, 1>, scalar_prefetch = 0 : i64, scratch_operands = 2 : i64, tpu.core_type = #tpu.core_type<tc>, window_params = [{transform_indices = @transform_0, window_bounds = array<i64: 1, 176, 32>}, {transform_indices = @transform_1, window_bounds = array<i64: 1, 176, 32>}, {transform_indices = @transform_2, window_bounds = array<i64: 1, 1, 1>}, {transform_indices = @transform_3, window_bounds = array<i64: 1, 1, 1>}]} {
    %c0_i32 = arith.constant 0 : i32
    %0 = arith.cmpi eq, %arg2, %c0_i32 : i32
    %1 = arith.extui %0 : i1 to i32
    %c0_i32_0 = arith.constant 0 : i32
    %2 = arith.cmpi ne, %1, %c0_i32_0 : i32
    scf.if %2 {
      %cst_23 = arith.constant 0.000000e+00 : f32
      %56 = vector.broadcast %cst_23 : f32 to vector<8x32xf32>
      %c0_24 = arith.constant 0 : index
      %c0_25 = arith.constant 0 : index
      %57 = vector.load %arg7[%c0_24, %c0_25] : memref<8x32xf32, #tpu.memory_space<vmem>>, vector<8x32xf32>
      tpu.vector_store %arg7[%c0_24, %c0_25], %56 {strides = array<i32>} : memref<8x32xf32, #tpu.memory_space<vmem>>, vector<8x32xf32>,
      %cst_26 = arith.constant 0.000000e+00 : f32
      %58 = vector.broadcast %cst_26 : f32 to vector<8x32xf32>
      %c0_27 = arith.constant 0 : index
      %c0_28 = arith.constant 0 : index
      %59 = vector.load %arg8[%c0_27, %c0_28] : memref<8x32xf32, #tpu.memory_space<vmem>>, vector<8x32xf32>
      tpu.vector_store %arg8[%c0_27, %c0_28], %58 {strides = array<i32>} : memref<8x32xf32, #tpu.memory_space<vmem>>, vector<8x32xf32>,
    } else {
    }
    %c0 = arith.constant 0 : index
    %c0_1 = arith.constant 0 : index
    %c0_2 = arith.constant 0 : index
    %3 = vector.load %arg4[%c0, %c0_1, %c0_2] : memref<1x176x32xf32, #tpu.memory_space<vmem>>, vector<1x176x32xf32>
    %4 = vector.shape_cast %3 : vector<1x176x32xf32> to vector<176x32xf32>
    %c0_3 = arith.constant 0 : index
    %c0_4 = arith.constant 0 : index
    %c0_5 = arith.constant 0 : index
    %5 = vector.load %arg3[%c0_3, %c0_4, %c0_5] : memref<1x176x32xf32, #tpu.memory_space<vmem>>, vector<1x176x32xf32>
    %6 = vector.shape_cast %5 : vector<1x176x32xf32> to vector<176x32xf32>
    %c1_i32 = arith.constant 1 : i32
    %7 = arith.muli %arg1, %c1_i32 : i32
    %8 = arith.addi %7, %arg2 : i32
    %c176_i32 = arith.constant 176 : i32
    %9 = arith.muli %8, %c176_i32 : i32
    %10 = tpu.iota {dimensions = array<i32: 0>} : vector<176x1xi32>
    %11 = vector.broadcast %9 : i32 to vector<176x1xi32>
    %12 = arith.addi %11, %10 : vector<176x1xi32>
    %c44_i32 = arith.constant 44 : i32
    %c0_i32_6 = arith.constant 0 : i32
    %13 = arith.cmpi eq, %c44_i32, %c0_i32_6 : i32
    %c1_i32_7 = arith.constant 1 : i32
    %14 = arith.select %13, %c1_i32_7, %c44_i32 : i32
    %15 = vector.broadcast %14 : i32 to vector<176x1xi32>
    %16 = arith.remsi %12, %15 : vector<176x1xi32>
    %c0_i32_8 = arith.constant 0 : i32
    %17 = vector.broadcast %c0_i32_8 : i32 to vector<176x1xi32>
    %18 = arith.cmpi ne, %16, %17 : vector<176x1xi32>
    %c0_i32_9 = arith.constant 0 : i32
    %19 = vector.broadcast %c0_i32_9 : i32 to vector<176x1xi32>
    %20 = arith.cmpi slt, %16, %19 : vector<176x1xi32>
    %c0_i32_10 = arith.constant 0 : i32
    %21 = arith.cmpi slt, %14, %c0_i32_10 : i32
    %22 = vector.broadcast %21 : i1 to vector<176x1xi1>
    %23 = vector.broadcast %22 : vector<176x1xi1> to vector<176x1xi1>
    %24 = arith.xori %20, %23 : vector<176x1xi1>
    %25 = arith.andi %24, %18 : vector<176x1xi1>
    %26 = vector.broadcast %14 : i32 to vector<176x1xi32>
    %27 = arith.addi %16, %26 : vector<176x1xi32>
    %28 = arith.select %25, %27, %16 : vector<176x1xi1>, vector<176x1xi32>
    %c14_i32 = arith.constant 14 : i32
    %29 = vector.broadcast %c14_i32 : i32 to vector<176x1xi32>
    %30 = arith.cmpi sge, %28, %29 : vector<176x1xi32>
    %c30_i32 = arith.constant 30 : i32
    %31 = vector.broadcast %c30_i32 : i32 to vector<176x1xi32>
    %32 = arith.cmpi slt, %28, %31 : vector<176x1xi32>
    %33 = arith.andi %30, %32 : vector<176x1xi1>
    %cst = arith.constant 1.000000e-03 : f32
    %34 = vector.broadcast %cst : f32 to vector<176x32xf32>
    %35 = arith.cmpf ogt, %4, %34 : vector<176x32xf32>
    %36 = vector.broadcast %33 : vector<176x1xi1> to vector<176x32xi1>
    %37 = arith.andi %35, %36 : vector<176x32xi1>
    %38 = arith.extui %37 : vector<176x32xi1> to vector<176x32xi32>
    %39 = arith.sitofp %38 : vector<176x32xi32> to vector<176x32xf32>
    %40 = arith.subf %4, %6 : vector<176x32xf32>
    %41 = arith.mulf %40, %39 : vector<176x32xf32>
    %42 = arith.mulf %41, %41 : vector<176x32xf32>
    %c0_11 = arith.constant 0 : index
    %c0_12 = arith.constant 0 : index
    %43 = vector.load %arg7[%c0_11, %c0_12] : memref<8x32xf32, #tpu.memory_space<vmem>>, vector<8x32xf32>
    %44 = vector.shape_cast %42 : vector<176x32xf32> to vector<22x8x32xf32>
    %cst_13 = arith.constant dense<0.000000e+00> : vector<8x32xf32>
    %45 = vector.multi_reduction <add>, %44, %cst_13 [0] : vector<22x8x32xf32> to vector<8x32xf32>
    %46 = arith.addf %43, %45 : vector<8x32xf32>
    %c0_14 = arith.constant 0 : index
    %c0_15 = arith.constant 0 : index
    %47 = vector.load %arg7[%c0_14, %c0_15] : memref<8x32xf32, #tpu.memory_space<vmem>>, vector<8x32xf32>
    tpu.vector_store %arg7[%c0_14, %c0_15], %46 {strides = array<i32>} : memref<8x32xf32, #tpu.memory_space<vmem>>, vector<8x32xf32>,
    %c0_16 = arith.constant 0 : index
    %c0_17 = arith.constant 0 : index
    %48 = vector.load %arg8[%c0_16, %c0_17] : memref<8x32xf32, #tpu.memory_space<vmem>>, vector<8x32xf32>
    %49 = vector.shape_cast %39 : vector<176x32xf32> to vector<22x8x32xf32>
    %cst_18 = arith.constant dense<0.000000e+00> : vector<8x32xf32>
    %50 = vector.multi_reduction <add>, %49, %cst_18 [0] : vector<22x8x32xf32> to vector<8x32xf32>
    %51 = arith.addf %48, %50 : vector<8x32xf32>
    %c0_19 = arith.constant 0 : index
    %c0_20 = arith.constant 0 : index
    %52 = vector.load %arg8[%c0_19, %c0_20] : memref<8x32xf32, #tpu.memory_space<vmem>>, vector<8x32xf32>
    tpu.vector_store %arg8[%c0_19, %c0_20], %51 {strides = array<i32>} : memref<8x32xf32, #tpu.memory_space<vmem>>, vector<8x32xf32>,
    %c0_i32_21 = arith.constant 0 : i32
    %53 = arith.cmpi eq, %arg2, %c0_i32_21 : i32
    %54 = arith.extui %53 : i1 to i32
    %c0_i32_22 = arith.constant 0 : i32
    %55 = arith.cmpi ne, %54, %c0_i32_22 : i32
    scf.if %55 {
      %56 = tpu.iota {dimensions = array<i32: 1>} : vector<1x32xi32>
      %c8_i32 = arith.constant 8 : i32
      %57 = vector.broadcast %c8_i32 : i32 to vector<1x32xi32>
      %58 = arith.cmpi sge, %56, %57 : vector<1x32xi32>
      %c24_i32 = arith.constant 24 : i32
      %59 = vector.broadcast %c24_i32 : i32 to vector<1x32xi32>
      %60 = arith.cmpi slt, %56, %59 : vector<1x32xi32>
      %61 = arith.andi %58, %60 : vector<1x32xi1>
      %62 = arith.extui %61 : vector<1x32xi1> to vector<1x32xi32>
      %63 = arith.sitofp %62 : vector<1x32xi32> to vector<1x32xf32>
      %c0_23 = arith.constant 0 : index
      %c0_24 = arith.constant 0 : index
      %64 = vector.load %arg7[%c0_23, %c0_24] : memref<8x32xf32, #tpu.memory_space<vmem>>, vector<8x32xf32>
      %65 = vector.broadcast %63 : vector<1x32xf32> to vector<8x32xf32>
      %66 = arith.mulf %64, %65 : vector<8x32xf32>
      %67 = vector.shape_cast %66 : vector<8x32xf32> to vector<1x8x32xf32>
      %cst_25 = arith.constant dense<0.000000e+00> : vector<1xf32>
      %68 = vector.multi_reduction <add>, %67, %cst_25 [1, 2] : vector<1x8x32xf32> to vector<1xf32>
      %69 = vector.shape_cast %68 : vector<1xf32> to vector<1x1x1xf32>
      %70 = vector.extract %69[0, 0, 0] : f32 from vector<1x1x1xf32>
      %71 = vector.broadcast %70 : f32 to vector<1x1xf32>
      %c0_26 = arith.constant 0 : index
      %c0_27 = arith.constant 0 : index
      %c0_28 = arith.constant 0 : index
      %72 = vector.load %arg5[%c0_26, %c0_27, %c0_28] : memref<1x1x1xf32, #tpu.memory_space<vmem>>, vector<1x1x1xf32>
      %73 = vector.shape_cast %72 : vector<1x1x1xf32> to vector<1x1xf32>
      %74 = vector.shape_cast %71 : vector<1x1xf32> to vector<1x1x1xf32>
      tpu.vector_store %arg5[%c0_26, %c0_27, %c0_28], %74 {strides = array<i32>} : memref<1x1x1xf32, #tpu.memory_space<vmem>>, vector<1x1x1xf32>,
      %c0_29 = arith.constant 0 : index
      %c0_30 = arith.constant 0 : index
      %75 = vector.load %arg8[%c0_29, %c0_30] : memref<8x32xf32, #tpu.memory_space<vmem>>, vector<8x32xf32>
      %76 = vector.broadcast %63 : vector<1x32xf32> to vector<8x32xf32>
      %77 = arith.mulf %75, %76 : vector<8x32xf32>
      %78 = vector.shape_cast %77 : vector<8x32xf32> to vector<1x8x32xf32>
      %cst_31 = arith.constant dense<0.000000e+00> : vector<1xf32>
      %79 = vector.multi_reduction <add>, %78, %cst_31 [1, 2] : vector<1x8x32xf32> to vector<1xf32>
      %80 = vector.shape_cast %79 : vector<1xf32> to vector<1x1x1xf32>
      %81 = vector.extract %80[0, 0, 0] : f32 from vector<1x1x1xf32>
      %82 = vector.broadcast %81 : f32 to vector<1x1xf32>
      %c0_32 = arith.constant 0 : index
      %c0_33 = arith.constant 0 : index
      %c0_34 = arith.constant 0 : index
      %83 = vector.load %arg6[%c0_32, %c0_33, %c0_34] : memref<1x1x1xf32, #tpu.memory_space<vmem>>, vector<1x1x1xf32>
      %84 = vector.shape_cast %83 : vector<1x1x1xf32> to vector<1x1xf32>
      %85 = vector.shape_cast %82 : vector<1x1xf32> to vector<1x1x1xf32>
      tpu.vector_store %arg6[%c0_32, %c0_33, %c0_34], %85 {strides = array<i32>} : memref<1x1x1xf32, #tpu.memory_space<vmem>>, vector<1x1x1xf32>,
    } else {
    }
    return
  }
  func.func @transform_0(%arg0: i32, %arg1: i32, %arg2: i32) -> (i32, i32, i32) {
    %c1_i32 = arith.constant 1 : i32
    %0 = arith.muli %arg1, %c1_i32 : i32
    %1 = arith.addi %0, %arg2 : i32
    %c0_i32 = arith.constant 0 : i32
    %c0_i32_0 = arith.constant 0 : i32
    return %arg0, %1, %c0_i32 : i32, i32, i32
  }
  func.func @transform_1(%arg0: i32, %arg1: i32, %arg2: i32) -> (i32, i32, i32) {
    %c1_i32 = arith.constant 1 : i32
    %0 = arith.muli %arg1, %c1_i32 : i32
    %1 = arith.addi %0, %arg2 : i32
    %c0_i32 = arith.constant 0 : i32
    %c0_i32_0 = arith.constant 0 : i32
    return %arg0, %1, %c0_i32 : i32, i32, i32
  }
  func.func @transform_2(%arg0: i32, %arg1: i32, %arg2: i32) -> (i32, i32, i32) {
    %c0_i32 = arith.constant 0 : i32
    %c0_i32_0 = arith.constant 0 : i32
    return %arg0, %arg1, %c0_i32 : i32, i32, i32
  }
  func.func @transform_3(%arg0: i32, %arg1: i32, %arg2: i32) -> (i32, i32, i32) {
    %c0_i32 = arith.constant 0 : i32
    %c0_i32_0 = arith.constant 0 : i32
    return %arg0, %arg1, %c0_i32 : i32, i32, i32
  }
}

</mosaic_0001>

<llo_original>
// kernel: tpu_custom_call.1
$region0: #{tpu_custom_call.1}
  #allocation0 [shape = 'u32[]', space=smem, size = 0x4, offset = 0x4, fixed_abs, tag = 'smem constant byte address 0x4 - core index']
  #allocation1 [shape = 'u32[144,128]{1,0:T(1,128)}', space=vmem, size = 0x12000, scoped, tag = 'internal scratch']
  #allocation2 [shape = 'f32[8,32]{1,0:T(8,128)}', space=vmem, size = 0x1000, scoped, tag = 'scratch operand']
  #allocation3 [shape = 'f32[8,32]{1,0:T(8,128)}', space=vmem, size = 0x1000, scoped, tag = 'scratch operand']
  %s0 = inlined_call_operand.hbm [shape: f32[2,176,32], index: 0, kind: input, shape index: {}]
  %s1 = inlined_call_operand.hbm [shape: f32[2,176,32], index: 1, kind: input, shape index: {}]
  %s2 = inlined_call_operand.hbm [shape: f32[2,1,1], index: 2, kind: output, shape index: {0}]
  %s3 = inlined_call_operand.hbm [shape: f32[2,1,1], index: 3, kind: output, shape index: {1}]
  %4 = xla_tuple %s2, %s3
  %s5 = sld [smem:[#allocation0]]
  $region65: #{tpu_custom_call.1} parent=0
    _
  %s7 = ssub.s32 1, %s5
  %s8 = scalar_select 0, %s7, %s5
  $region1: #{tpu_custom_call.1} parent=0
    #allocation4 [shape = 'u8[180224]{0}', space=vmem, size = 0x2c000, scoped, tag = 'input window, operand 0']
    #allocation5 [shape = 's32[2]{0}', space=sflag, size = 0x8, scoped, tag = 'scoped memory for tpu_custom_call.1']
    #allocation6 [shape = 's32[2]{0}', space=sflag, size = 0x8, scoped, tag = 'scoped memory for tpu_custom_call.1']
    #allocation7 [shape = 'u8[180224]{0}', space=vmem, size = 0x2c000, scoped, tag = 'input window, operand 1']
    #allocation8 [shape = 's32[2]{0}', space=sflag, size = 0x8, scoped, tag = 'scoped memory for tpu_custom_call.1']
    #allocation9 [shape = 'u8[1024]{0}', space=vmem, size = 0x400, scoped, tag = 'output window, operand 0']
    #allocation10 [shape = 'u8[1024]{0}', space=vmem, size = 0x400, scoped, tag = 'output window, operand 1']
    #allocation11 [shape = 's32[2]{0}', space=sflag, size = 0x8, scoped, tag = 'scoped memory for tpu_custom_call.1']
    %9 = vsyncpa [#allocation5], 0
    %s10 = scalar_lea.sflag [#allocation5], 1
    %11 = vsyncpa %s10, 0
    %12 = vsyncpa [#allocation8], 0
    %s13 = scalar_lea.sflag [#allocation8], 1
    %14 = vsyncpa %s13, 0
    %15 = vsyncpa [#allocation6], 0
    %s16 = scalar_lea.sflag [#allocation6], 1
    %17 = vsyncpa %s16, 0
    %18 = vsyncpa [#allocation11], 0
    %s19 = scalar_lea.sflag [#allocation11], 1
    %20 = vsyncpa %s19, 0
    loop: start=0, step=1, limit=4
    $region2: #{tpu_custom_call.1} parent=1 // loop_pre_header
      _
    $region3: #{tpu_custom_call.1} parent=1 // loop_header
      %s22 = sphi 0, %s26
      %p23 = scmp.ge.s32.totalorder %s22, 4
      %s29 = sphi 0, %s48
      %s30 = sphi 0, %s44
      %s31 = sphi 0, %s40
      %s32 = sphi 0, %s29
      %s33 = sphi 0, %s30
      %s34 = sphi 0, %s31
      %s35 = sphi 0, %s32
      %s36 = sphi 0, %s33
      %s37 = sphi 0, %s34
      %s55 = sphi 0, %s57
      %s58 = sphi 0, %s55
      %s59 = sphi 0, %s58
      %s75 = sphi 0, %s59
      %s85 = sphi 0, %s87
      %s88 = sphi 0, %s85
      %s89 = sphi 0, %s88
      %s105 = sphi 0, %s89
      %s113 = sphi 0, %s115
      %s116 = sphi 0, %s113
      %s117 = sphi 0, %s116
      %s133 = sphi 0, %s117
      %s141 = sphi 0, %s143
      %s144 = sphi 0, %s141
      %s145 = sphi 0, %s144
      %s161 = sphi 0, %s145
    $region4: #{tpu_custom_call.1} parent=1 // loop_header_branch
      %25 = sbr.rel (%p23) target = $region8
    $region5: #{tpu_custom_call.1} parent=1 // loop_body
      %s27 = ssub.s32 %s22, 1
      %s28 = ssub.s32 %s22, 2
      %s38 = sadd.s32 1, %s31
      %p39 = scmp.ge.s32.totalorder %s38, 1
      %s40 = scalar_select %p39, 0, %s38
      %s41 = sadd.s32 1, %s30
      %s42 = scalar_select %p39, %s41, %s30
      %p43 = scmp.ge.s32.totalorder %s42, 1
      %s44 = scalar_select %p43, 0, %s42
      %s45 = sadd.s32 1, %s29
      %s46 = scalar_select %p43, %s45, %s29
      %p47 = scmp.ge.s32.totalorder %s46, 2
      %s48 = scalar_select %p47, 0, %s46
      %s49 = sadd.s32 %s30, %s31
      %s50 = sadd.s32 %s44, %s40
      %s51 = ssub.s32 %s29, %s48
      %s52 = ssub.s32 %s49, %s50
      %s53 = sor.u32 %s51, %s52
      %p54 = scmp.eq.s32.totalorder %s53, 0
      %s56 = sadd.s32 %s55, 1
      %s57 = scalar_select %p54, %s55, %s56
      %p60 = pneg %p54
      %p61 = scmp.eq.s32.totalorder %s22, 1
      %p62 = por %p60, %p61
      %p63 = scmp.ne.s32.totalorder %s55, %s58
      %p64 = scmp.eq.s32.totalorder %s22, 0
      %p65 = por %p63, %p64
      %p66 = scmp.ne.s32.totalorder %s55, %s58
      %p67 = scmp.eq.s32.totalorder %s27, 1
      %p68 = por %p66, %p67
      %p69 = scmp.ne.s32.totalorder %s58, %s59
      %p70 = scmp.eq.s32.totalorder %s27, 0
      %p71 = por %p69, %p70
      %p72 = scmp.ne.s32.totalorder %s58, %s59
      %p73 = scmp.eq.s32.totalorder %s28, 1
      %p74 = por %p72, %p73
      %p76 = scmp.ne.s32.totalorder %s59, %s75
      %p77 = scmp.eq.s32.totalorder %s28, 0
      %p78 = por %p76, %p77
      %s79 = sadd.s32 %s30, %s31
      %s80 = sadd.s32 %s44, %s40
      %s81 = ssub.s32 %s29, %s48
      %s82 = ssub.s32 %s79, %s80
      %s83 = sor.u32 %s81, %s82
      %p84 = scmp.eq.s32.totalorder %s83, 0
      %s86 = sadd.s32 %s85, 1
      %s87 = scalar_select %p84, %s85, %s86
      %p90 = pneg %p84
      %p91 = scmp.eq.s32.totalorder %s22, 1
      %p92 = por %p90, %p91
      %p93 = scmp.ne.s32.totalorder %s85, %s88
      %p94 = scmp.eq.s32.totalorder %s22, 0
      %p95 = por %p93, %p94
      %p96 = scmp.ne.s32.totalorder %s85, %s88
      %p97 = scmp.eq.s32.totalorder %s27, 1
      %p98 = por %p96, %p97
      %p99 = scmp.ne.s32.totalorder %s88, %s89
      %p100 = scmp.eq.s32.totalorder %s27, 0
      %p101 = por %p99, %p100
      %p102 = scmp.ne.s32.totalorder %s88, %s89
      %p103 = scmp.eq.s32.totalorder %s28, 1
      %p104 = por %p102, %p103
      %p106 = scmp.ne.s32.totalorder %s89, %s105
      %p107 = scmp.eq.s32.totalorder %s28, 0
      %p108 = por %p106, %p107
      %s109 = ssub.s32 %s29, %s48
      %s110 = ssub.s32 %s30, %s44
      %s111 = sor.u32 %s109, %s110
      %p112 = scmp.eq.s32.totalorder %s111, 0
      %s114 = sadd.s32 %s113, 1
      %s115 = scalar_select %p112, %s113, %s114
      %p118 = pneg %p112
      %p119 = scmp.eq.s32.totalorder %s22, 1
      %p120 = por %p118, %p119
      %p121 = scmp.ne.s32.totalorder %s113, %s116
      %p122 = scmp.eq.s32.totalorder %s22, 0
      %p123 = por %p121, %p122
      %p124 = scmp.ne.s32.totalorder %s113, %s116
      %p125 = scmp.eq.s32.totalorder %s27, 1
      %p126 = por %p124, %p125
      %p127 = scmp.ne.s32.totalorder %s116, %s117
      %p128 = scmp.eq.s32.totalorder %s27, 0
      %p129 = por %p127, %p128
      %p130 = scmp.ne.s32.totalorder %s116, %s117
      %p131 = scmp.eq.s32.totalorder %s28, 1
      %p132 = por %p130, %p131
      %p134 = scmp.ne.s32.totalorder %s117, %s133
      %p135 = scmp.eq.s32.totalorder %s28, 0
      %p136 = por %p134, %p135
      %s137 = ssub.s32 %s29, %s48
      %s138 = ssub.s32 %s30, %s44
      %s139 = sor.u32 %s137, %s138
      %p140 = scmp.eq.s32.totalorder %s139, 0
      %s142 = sadd.s32 %s141, 1
      %s143 = scalar_select %p140, %s141, %s142
      %p146 = pneg %p140
      %p147 = scmp.eq.s32.totalorder %s22, 1
      %p148 = por %p146, %p147
      %p149 = scmp.ne.s32.totalorder %s141, %s144
      %p150 = scmp.eq.s32.totalorder %s22, 0
      %p151 = por %p149, %p150
      %p152 = scmp.ne.s32.totalorder %s141, %s144
      %p153 = scmp.eq.s32.totalorder %s27, 1
      %p154 = por %p152, %p153
      %p155 = scmp.ne.s32.totalorder %s144, %s145
      %p156 = scmp.eq.s32.totalorder %s27, 0
      %p157 = por %p155, %p156
      %p158 = scmp.ne.s32.totalorder %s144, %s145
      %p159 = scmp.eq.s32.totalorder %s28, 1
      %p160 = por %p158, %p159
      %p162 = scmp.ne.s32.totalorder %s145, %s161
      %p163 = scmp.eq.s32.totalorder %s28, 0
      %p164 = por %p162, %p163
      %p165 = scmp.le.s32.totalorder 1, %s22
      %p166 = scmp.lt.s32.totalorder %s22, 3
      %p167 = pnand %p165, %p166
      %p168 = pneg %p167
      // Predicated region
      $region9: #{tpu_custom_call.1} parent=5 // pred_check
        _
      $region10: #{tpu_custom_call.1} parent=5 // pred_check_branch
        %170 = sbr.rel (%p167) target = $region12
      $region11: #{tpu_custom_call.1} parent=5 // pred_region
        %s171 = ssub.s32 %s22, 1
      $region12: #{tpu_custom_call.1} parent=5 // pred_fallthru
        _
      %p172 = scmp.lt.s32.totalorder %s22, 2
      // Predicated region
      $region13: #{tpu_custom_call.1} parent=5 // pred_check
        %p173 = pneg %p172
      $region14: #{tpu_custom_call.1} parent=5 // pred_check_branch
        %175 = sbr.rel (%p173) target = $region16
      $region15: #{tpu_custom_call.1} parent=5 // pred_region
        // Predicated region
        $region17: #{tpu_custom_call.1} parent=15 // pred_check
          %p176 = pneg %p65
        $region18: #{tpu_custom_call.1} parent=15 // pred_check_branch
          %178 = sbr.rel (%p176) target = $region20
        $region19: #{tpu_custom_call.1} parent=15 // pred_region
          %s179 = sand.u32 %s55, 1
          %s180 = scalar_lea.sflag [#allocation5], %s179
          %s181 = sand.u32 %s55, 1
          %s182 = smul.addr %s181, 176
          %s183 = scalar_lea.vmem [#allocation4], %s182
          %s184 = sadd.s32 %s30, %s31
          %s185 = smul.u32 22, %s184
          %s187 = ssub.s32 2816, 2816
          %188 = vsyncadd %s180, %s187
          %s189 = smul.addr %s29, 22
          %s190 = sadd.s32 %s185, %s189
          %s191 = smul.addr %s190, 128
          %s192 = scalar_lea.hbm %s0, %s191
          %s193 = sshll.u32 %s183, 4
          %s194 = int_to_ptr.vmem [resolvable:$true] %s193
          %199 = dma.hbm_to_vmem [thread:$0]  %s192, 2816, %s194, %s180, 128, 128, 8
        $region20: #{tpu_custom_call.1} parent=15 // pred_fallthru
          _
        // Predicated region
        $region21: #{tpu_custom_call.1} parent=15 // pred_check
          %p200 = pneg %p95
        $region22: #{tpu_custom_call.1} parent=15 // pred_check_branch
          %202 = sbr.rel (%p200) target = $region24
        $region23: #{tpu_custom_call.1} parent=15 // pred_region
          %s203 = sand.u32 %s85, 1
          %s204 = scalar_lea.sflag [#allocation8], %s203
          %s205 = sand.u32 %s85, 1
          %s206 = smul.addr %s205, 176
          %s207 = scalar_lea.vmem [#allocation7], %s206
          %s208 = sadd.s32 %s30, %s31
          %s209 = smul.u32 22, %s208
          %s211 = ssub.s32 2816, 2816
          %212 = vsyncadd %s204, %s211
          %s213 = smul.addr %s29, 22
          %s214 = sadd.s32 %s209, %s213
          %s215 = smul.addr %s214, 128
          %s216 = scalar_lea.hbm %s1, %s215
          %s217 = sshll.u32 %s207, 4
          %s218 = int_to_ptr.vmem [resolvable:$true] %s217
          %223 = dma.hbm_to_vmem [thread:$0]  %s216, 2816, %s218, %s204, 128, 128, 8
        $region24: #{tpu_custom_call.1} parent=15 // pred_fallthru
          _
      $region16: #{tpu_custom_call.1} parent=5 // pred_fallthru
        _
      %p224 = scmp.le.s32.totalorder 1, %s22
      %p225 = scmp.lt.s32.totalorder %s22, 3
      %p226 = pnand %p224, %p225
      %p227 = pneg %p226
      // Predicated region
      $region25: #{tpu_custom_call.1} parent=5 // pred_check
        _
      $region26: #{tpu_custom_call.1} parent=5 // pred_check_branch
        %229 = sbr.rel (%p226) target = $region28
      $region27: #{tpu_custom_call.1} parent=5 // pred_region
        %s230 = ssub.s32 %s22, 1
        %s231 = sand.u32 %s58, 1
        %s232 = scalar_lea.sflag [#allocation5], %s231
        %s233 = sand.u32 %s58, 1
        %s234 = smul.addr %s233, 176
        %s235 = scalar_lea.vmem [#allocation4], %s234
        // Predicated region
        $region29: #{tpu_custom_call.1} parent=27 // pred_check
          %p236 = pneg %p71
        $region30: #{tpu_custom_call.1} parent=27 // pred_check_branch
          %238 = sbr.rel (%p236) target = $region32
        $region31: #{tpu_custom_call.1} parent=27 // pred_region
          %239 = dma.done %s232, 2816
        $region32: #{tpu_custom_call.1} parent=27 // pred_fallthru
          _
        %s240 = sand.u32 %s88, 1
        %s241 = scalar_lea.sflag [#allocation8], %s240
        %s242 = sand.u32 %s88, 1
        %s243 = smul.addr %s242, 176
        %s244 = scalar_lea.vmem [#allocation7], %s243
        // Predicated region
        $region33: #{tpu_custom_call.1} parent=27 // pred_check
          %p245 = pneg %p101
        $region34: #{tpu_custom_call.1} parent=27 // pred_check_branch
          %247 = sbr.rel (%p245) target = $region36
        $region35: #{tpu_custom_call.1} parent=27 // pred_region
          %248 = dma.done %s241, 2816
        $region36: #{tpu_custom_call.1} parent=27 // pred_fallthru
          _
        %s249 = sand.u32 %s58, 1
        %s250 = scalar_lea.sflag [#allocation5], %s249
        %s251 = sand.u32 %s58, 1
        %s252 = smul.addr %s251, 176
        %s253 = scalar_lea.vmem [#allocation4], %s252
        %p254 = pneg %p71
        %p255 = pneg %p68
        %s256 = sand.u32 %s88, 1
        %s257 = scalar_lea.sflag [#allocation8], %s256
        %s258 = sand.u32 %s88, 1
        %s259 = smul.addr %s258, 176
        %s260 = scalar_lea.vmem [#allocation7], %s259
        %p261 = pneg %p101
        %p262 = pneg %p98
        %p263 = pneg %p129
        %p264 = pneg %p126
        %s265 = sand.u32 %s116, 1
        %s266 = scalar_lea.sflag [#allocation6], %s265
        %s267 = sand.u32 %s116, 1
        %s268 = scalar_lea.vmem [#allocation9], %s267
        %p269 = pneg %p157
        %p270 = pneg %p154
        %s271 = sand.u32 %s144, 1
        %s272 = scalar_lea.sflag [#allocation11], %s271
        %s273 = sand.u32 %s144, 1
        %s274 = scalar_lea.vmem [#allocation10], %s273
        %s275 = sadd.s32 %s33, %s34
        %s276 = smul.u32 22, %s275
        %s277 = sadd.s32 %s33, %s34
        %s278 = smul.u32 22, %s277
        %p279 = scmp.eq.s32.totalorder %s34, 0
        // Predicated region
        $region37: #{tpu_custom_call.1} parent=27 // pred_check
          %p280 = pneg %p279
        $region38: #{tpu_custom_call.1} parent=27 // pred_check_branch
          %282 = sbr.rel (%p280) target = $region40
        $region39: #{tpu_custom_call.1} parent=27 // pred_region
          %vm283 = vcmask 261120
          %284 = vst.msk [vmem:[#allocation2] sm:$0xff] %vm283, 0.0
          %285 = vst.msk [vmem:[#allocation3] sm:$0xff] %vm283, 0.0
        $region40: #{tpu_custom_call.1} parent=27 // pred_fallthru
          _
        %v286 = vld [vmem:[%s244] sm:$0xff]
        %v287 = vld [vmem:[%s244 + $0x8] sm:$0xff]
        %v288 = vld [vmem:[%s244 + $0x10] sm:$0xff]
        %v289 = vld [vmem:[%s244 + $0x18] sm:$0xff]
        %v290 = vld [vmem:[%s244 + $0x20] sm:$0xff]
        %v291 = vld [vmem:[%s244 + $0x28] sm:$0xff]
        %v292 = vld [vmem:[%s244 + $0x30] sm:$0xff]
        %v293 = vld [vmem:[%s244 + $0x38] sm:$0xff]
        %v294 = vld [vmem:[%s244 + $0x40] sm:$0xff]
        %v295 = vld [vmem:[%s244 + $0x48] sm:$0xff]
        %v296 = vld [vmem:[%s244 + $0x50] sm:$0xff]
        %v297 = vld [vmem:[%s244 + $0x58] sm:$0xff]
        %v298 = vld [vmem:[%s244 + $0x60] sm:$0xff]
        %v299 = vld [vmem:[%s244 + $0x68] sm:$0xff]
        %v300 = vld [vmem:[%s244 + $0x70] sm:$0xff]
        %v301 = vld [vmem:[%s244 + $0x78] sm:$0xff]
        %v302 = vld [vmem:[%s244 + $0x80] sm:$0xff]
        %v303 = vld [vmem:[%s244 + $0x88] sm:$0xff]
        %v304 = vld [vmem:[%s244 + $0x90] sm:$0xff]
        %v305 = vld [vmem:[%s244 + $0x98] sm:$0xff]
        %v306 = vld [vmem:[%s244 + $0xa0] sm:$0xff]
        %v307 = vld [vmem:[%s244 + $0xa8] sm:$0xff]
        %v308 = vld [vmem:[%s235] sm:$0xff]
        %v309 = vld [vmem:[%s235 + $0x8] sm:$0xff]
        %v310 = vld [vmem:[%s235 + $0x10] sm:$0xff]
        %v311 = vld [vmem:[%s235 + $0x18] sm:$0xff]
        %v312 = vld [vmem:[%s235 + $0x20] sm:$0xff]
        %v313 = vld [vmem:[%s235 + $0x28] sm:$0xff]
        %v314 = vld [vmem:[%s235 + $0x30] sm:$0xff]
        %v315 = vld [vmem:[%s235 + $0x38] sm:$0xff]
        %v316 = vld [vmem:[%s235 + $0x40] sm:$0xff]
        %v317 = vld [vmem:[%s235 + $0x48] sm:$0xff]
        %v318 = vld [vmem:[%s235 + $0x50] sm:$0xff]
        %v319 = vld [vmem:[%s235 + $0x58] sm:$0xff]
        %v320 = vld [vmem:[%s235 + $0x60] sm:$0xff]
        %v321 = vld [vmem:[%s235 + $0x68] sm:$0xff]
        %v322 = vld [vmem:[%s235 + $0x70] sm:$0xff]
        %v323 = vld [vmem:[%s235 + $0x78] sm:$0xff]
        %v324 = vld [vmem:[%s235 + $0x80] sm:$0xff]
        %v325 = vld [vmem:[%s235 + $0x88] sm:$0xff]
        %v326 = vld [vmem:[%s235 + $0x90] sm:$0xff]
        %v327 = vld [vmem:[%s235 + $0x98] sm:$0xff]
        %v328 = vld [vmem:[%s235 + $0xa0] sm:$0xff]
        %v329 = vld [vmem:[%s235 + $0xa8] sm:$0xff]
        %s330 = sadd.s32 %s33, %s34
        %s331 = smul.u32 %s330, 176
        %v332 = vlaneseq
        %v333 = vshrl.u32 %v332, 7
        %v334 = vadd.s32 %v333, 8
        %v335 = vadd.s32 %v333, 16
        %v336 = vadd.s32 %v333, 24
        %v337 = vadd.s32 %v333, 32
        %v338 = vadd.s32 %v333, 40
        %v339 = vadd.s32 %v333, 48
        %v340 = vadd.s32 %v333, 56
        %v341 = vadd.s32 %v333, 64
        %v342 = vadd.s32 %v333, 72
        %v343 = vadd.s32 %v333, 80
        %v344 = vadd.s32 %v333, 88
        %v345 = vadd.s32 %v333, 96
        %v346 = vadd.s32 %v333, 104
        %v347 = vadd.s32 %v333, 112
        %v348 = vadd.s32 %v333, 120
        %v349 = vadd.s32 %v333, 128
        %v350 = vadd.s32 %v333, 136
        %v351 = vadd.s32 %v333, 144
        %v352 = vadd.s32 %v333, 152
        %v353 = vadd.s32 %v333, 160
        %v354 = vadd.s32 %v333, 168
        %v355 = vstv %s331
        %v356 = vadd.s32 %v355, %v333
        %v357 = vadd.s32 %v355, %v334
        %v358 = vadd.s32 %v355, %v335
        %v359 = vadd.s32 %v355, %v336
        %v360 = vadd.s32 %v355, %v337
        %v361 = vadd.s32 %v355, %v338
        %v362 = vadd.s32 %v355, %v339
        %v363 = vadd.s32 %v355, %v340
        %v364 = vadd.s32 %v355, %v341
        %v365 = vadd.s32 %v355, %v342
        %v366 = vadd.s32 %v355, %v343
        %v367 = vadd.s32 %v355, %v344
        %v368 = vadd.s32 %v355, %v345
        %v369 = vadd.s32 %v355, %v346
        %v370 = vadd.s32 %v355, %v347
        %v371 = vadd.s32 %v355, %v348
        %v372 = vadd.s32 %v355, %v349
        %v373 = vadd.s32 %v355, %v350
        %v374 = vadd.s32 %v355, %v351
        %v375 = vadd.s32 %v355, %v352
        %v376 = vadd.s32 %v355, %v353
        %v377 = vadd.s32 %v355, %v354
        %vm378 = vcmp.lt.s32.totalorder %v356, 0
        %v379 = vsub.s32 0, %v356
        %v380 = vsel %vm378, %v379, %v356
        %v381 = vmul.u32.u64.compose %v380, 3123612579
        %v382 = vextract.low.u32 %v381
        %v383 = vextract.high.u32 %v381
        %v384 = vshrl.u32 %v383, 5
        %v385 = vmul.u32 %v384, 44
        %v386 = vsub.s32 %v380, %v385
        %v387 = vsub.s32 0, %v386
        %v388 = vsel %vm378, %v387, %v386
        %vm389 = vcmp.lt.s32.totalorder %v357, 0
        %v390 = vsub.s32 0, %v357
        %v391 = vsel %vm389, %v390, %v357
        %v392 = vmul.u32.u64.compose %v391, 3123612579
        %v393 = vextract.low.u32 %v392
        %v394 = vextract.high.u32 %v392
        %v395 = vshrl.u32 %v394, 5
        %v396 = vmul.u32 %v395, 44
        %v397 = vsub.s32 %v391, %v396
        %v398 = vsub.s32 0, %v397
        %v399 = vsel %vm389, %v398, %v397
        %vm400 = vcmp.lt.s32.totalorder %v358, 0
        %v401 = vsub.s32 0, %v358
        %v402 = vsel %vm400, %v401, %v358
        %v403 = vmul.u32.u64.compose %v402, 3123612579
        %v404 = vextract.low.u32 %v403
        %v405 = vextract.high.u32 %v403
        %v406 = vshrl.u32 %v405, 5
        %v407 = vmul.u32 %v406, 44
        %v408 = vsub.s32 %v402, %v407
        %v409 = vsub.s32 0, %v408
        %v410 = vsel %vm400, %v409, %v408
        %vm411 = vcmp.lt.s32.totalorder %v359, 0
        %v412 = vsub.s32 0, %v359
        %v413 = vsel %vm411, %v412, %v359
        %v414 = vmul.u32.u64.compose %v413, 3123612579
        %v415 = vextract.low.u32 %v414
        %v416 = vextract.high.u32 %v414
        %v417 = vshrl.u32 %v416, 5
        %v418 = vmul.u32 %v417, 44
        %v419 = vsub.s32 %v413, %v418
        %v420 = vsub.s32 0, %v419
        %v421 = vsel %vm411, %v420, %v419
        %vm422 = vcmp.lt.s32.totalorder %v360, 0
        %v423 = vsub.s32 0, %v360
        %v424 = vsel %vm422, %v423, %v360
        %v425 = vmul.u32.u64.compose %v424, 3123612579
        %v426 = vextract.low.u32 %v425
        %v427 = vextract.high.u32 %v425
        %v428 = vshrl.u32 %v427, 5
        %v429 = vmul.u32 %v428, 44
        %v430 = vsub.s32 %v424, %v429
        %v431 = vsub.s32 0, %v430
        %v432 = vsel %vm422, %v431, %v430
        %vm433 = vcmp.lt.s32.totalorder %v361, 0
        %v434 = vsub.s32 0, %v361
        %v435 = vsel %vm433, %v434, %v361
        %v436 = vmul.u32.u64.compose %v435, 3123612579
        %v437 = vextract.low.u32 %v436
        %v438 = vextract.high.u32 %v436
        %v439 = vshrl.u32 %v438, 5
        %v440 = vmul.u32 %v439, 44
        %v441 = vsub.s32 %v435, %v440
        %v442 = vsub.s32 0, %v441
        %v443 = vsel %vm433, %v442, %v441
        %vm444 = vcmp.lt.s32.totalorder %v362, 0
        %v445 = vsub.s32 0, %v362
        %v446 = vsel %vm444, %v445, %v362
        %v447 = vmul.u32.u64.compose %v446, 3123612579
        %v448 = vextract.low.u32 %v447
        %v449 = vextract.high.u32 %v447
        %v450 = vshrl.u32 %v449, 5
        %v451 = vmul.u32 %v450, 44
        %v452 = vsub.s32 %v446, %v451
        %v453 = vsub.s32 0, %v452
        %v454 = vsel %vm444, %v453, %v452
        %vm455 = vcmp.lt.s32.totalorder %v363, 0
        %v456 = vsub.s32 0, %v363
        %v457 = vsel %vm455, %v456, %v363
        %v458 = vmul.u32.u64.compose %v457, 3123612579
        %v459 = vextract.low.u32 %v458
        %v460 = vextract.high.u32 %v458
        %v461 = vshrl.u32 %v460, 5
        %v462 = vmul.u32 %v461, 44
        %v463 = vsub.s32 %v457, %v462
        %v464 = vsub.s32 0, %v463
        %v465 = vsel %vm455, %v464, %v463
        %vm466 = vcmp.lt.s32.totalorder %v364, 0
        %v467 = vsub.s32 0, %v364
        %v468 = vsel %vm466, %v467, %v364
        %v469 = vmul.u32.u64.compose %v468, 3123612579
        %v470 = vextract.low.u32 %v469
        %v471 = vextract.high.u32 %v469
        %v472 = vshrl.u32 %v471, 5
        %v473 = vmul.u32 %v472, 44
        %v474 = vsub.s32 %v468, %v473
        %v475 = vsub.s32 0, %v474
        %v476 = vsel %vm466, %v475, %v474
        %vm477 = vcmp.lt.s32.totalorder %v365, 0
        %v478 = vsub.s32 0, %v365
        %v479 = vsel %vm477, %v478, %v365
        %v480 = vmul.u32.u64.compose %v479, 3123612579
        %v481 = vextract.low.u32 %v480
        %v482 = vextract.high.u32 %v480
        %v483 = vshrl.u32 %v482, 5
        %v484 = vmul.u32 %v483, 44
        %v485 = vsub.s32 %v479, %v484
        %v486 = vsub.s32 0, %v485
        %v487 = vsel %vm477, %v486, %v485
        %vm488 = vcmp.lt.s32.totalorder %v366, 0
        %v489 = vsub.s32 0, %v366
        %v490 = vsel %vm488, %v489, %v366
        %v491 = vmul.u32.u64.compose %v490, 3123612579
        %v492 = vextract.low.u32 %v491
        %v493 = vextract.high.u32 %v491
        %v494 = vshrl.u32 %v493, 5
        %v495 = vmul.u32 %v494, 44
        %v496 = vsub.s32 %v490, %v495
        %v497 = vsub.s32 0, %v496
        %v498 = vsel %vm488, %v497, %v496
        %vm499 = vcmp.lt.s32.totalorder %v367, 0
        %v500 = vsub.s32 0, %v367
        %v501 = vsel %vm499, %v500, %v367
        %v502 = vmul.u32.u64.compose %v501, 3123612579
        %v503 = vextract.low.u32 %v502
        %v504 = vextract.high.u32 %v502
        %v505 = vshrl.u32 %v504, 5
        %v506 = vmul.u32 %v505, 44
        %v507 = vsub.s32 %v501, %v506
        %v508 = vsub.s32 0, %v507
        %v509 = vsel %vm499, %v508, %v507
        %vm510 = vcmp.lt.s32.totalorder %v368, 0
        %v511 = vsub.s32 0, %v368
        %v512 = vsel %vm510, %v511, %v368
        %v513 = vmul.u32.u64.compose %v512, 3123612579
        %v514 = vextract.low.u32 %v513
        %v515 = vextract.high.u32 %v513
        %v516 = vshrl.u32 %v515, 5
        %v517 = vmul.u32 %v516, 44
        %v518 = vsub.s32 %v512, %v517
        %v519 = vsub.s32 0, %v518
        %v520 = vsel %vm510, %v519, %v518
        %vm521 = vcmp.lt.s32.totalorder %v369, 0
        %v522 = vsub.s32 0, %v369
        %v523 = vsel %vm521, %v522, %v369
        %v524 = vmul.u32.u64.compose %v523, 3123612579
        %v525 = vextract.low.u32 %v524
        %v526 = vextract.high.u32 %v524
        %v527 = vshrl.u32 %v526, 5
        %v528 = vmul.u32 %v527, 44
        %v529 = vsub.s32 %v523, %v528
        %v530 = vsub.s32 0, %v529
        %v531 = vsel %vm521, %v530, %v529
        %vm532 = vcmp.lt.s32.totalorder %v370, 0
        %v533 = vsub.s32 0, %v370
        %v534 = vsel %vm532, %v533, %v370
        %v535 = vmul.u32.u64.compose %v534, 3123612579
        %v536 = vextract.low.u32 %v535
        %v537 = vextract.high.u32 %v535
        %v538 = vshrl.u32 %v537, 5
        %v539 = vmul.u32 %v538, 44
        %v540 = vsub.s32 %v534, %v539
        %v541 = vsub.s32 0, %v540
        %v542 = vsel %vm532, %v541, %v540
        %vm543 = vcmp.lt.s32.totalorder %v371, 0
        %v544 = vsub.s32 0, %v371
        %v545 = vsel %vm543, %v544, %v371
        %v546 = vmul.u32.u64.compose %v545, 3123612579
        %v547 = vextract.low.u32 %v546
        %v548 = vextract.high.u32 %v546
        %v549 = vshrl.u32 %v548, 5
        %v550 = vmul.u32 %v549, 44
        %v551 = vsub.s32 %v545, %v550
        %v552 = vsub.s32 0, %v551
        %v553 = vsel %vm543, %v552, %v551
        %vm554 = vcmp.lt.s32.totalorder %v372, 0
        %v555 = vsub.s32 0, %v372
        %v556 = vsel %vm554, %v555, %v372
        %v557 = vmul.u32.u64.compose %v556, 3123612579
        %v558 = vextract.low.u32 %v557
        %v559 = vextract.high.u32 %v557
        %v560 = vshrl.u32 %v559, 5
        %v561 = vmul.u32 %v560, 44
        %v562 = vsub.s32 %v556, %v561
        %v563 = vsub.s32 0, %v562
        %v564 = vsel %vm554, %v563, %v562
        %vm565 = vcmp.lt.s32.totalorder %v373, 0
        %v566 = vsub.s32 0, %v373
        %v567 = vsel %vm565, %v566, %v373
        %v568 = vmul.u32.u64.compose %v567, 3123612579
        %v569 = vextract.low.u32 %v568
        %v570 = vextract.high.u32 %v568
        %v571 = vshrl.u32 %v570, 5
        %v572 = vmul.u32 %v571, 44
        %v573 = vsub.s32 %v567, %v572
        %v574 = vsub.s32 0, %v573
        %v575 = vsel %vm565, %v574, %v573
        %vm576 = vcmp.lt.s32.totalorder %v374, 0
        %v577 = vsub.s32 0, %v374
        %v578 = vsel %vm576, %v577, %v374
        %v579 = vmul.u32.u64.compose %v578, 3123612579
        %v580 = vextract.low.u32 %v579
        %v581 = vextract.high.u32 %v579
        %v582 = vshrl.u32 %v581, 5
        %v583 = vmul.u32 %v582, 44
        %v584 = vsub.s32 %v578, %v583
        %v585 = vsub.s32 0, %v584
        %v586 = vsel %vm576, %v585, %v584
        %vm587 = vcmp.lt.s32.totalorder %v375, 0
        %v588 = vsub.s32 0, %v375
        %v589 = vsel %vm587, %v588, %v375
        %v590 = vmul.u32.u64.compose %v589, 3123612579
        %v591 = vextract.low.u32 %v590
        %v592 = vextract.high.u32 %v590
        %v593 = vshrl.u32 %v592, 5
        %v594 = vmul.u32 %v593, 44
        %v595 = vsub.s32 %v589, %v594
        %v596 = vsub.s32 0, %v595
        %v597 = vsel %vm587, %v596, %v595
        %vm598 = vcmp.lt.s32.totalorder %v376, 0
        %v599 = vsub.s32 0, %v376
        %v600 = vsel %vm598, %v599, %v376
        %v601 = vmul.u32.u64.compose %v600, 3123612579
        %v602 = vextract.low.u32 %v601
        %v603 = vextract.high.u32 %v601
        %v604 = vshrl.u32 %v603, 5
        %v605 = vmul.u32 %v604, 44
        %v606 = vsub.s32 %v600, %v605
        %v607 = vsub.s32 0, %v606
        %v608 = vsel %vm598, %v607, %v606
        %vm609 = vcmp.lt.s32.totalorder %v377, 0
        %v610 = vsub.s32 0, %v377
        %v611 = vsel %vm609, %v610, %v377
        %v612 = vmul.u32.u64.compose %v611, 3123612579
        %v613 = vextract.low.u32 %v612
        %v614 = vextract.high.u32 %v612
        %v615 = vshrl.u32 %v614, 5
        %v616 = vmul.u32 %v615, 44
        %v617 = vsub.s32 %v611, %v616
        %v618 = vsub.s32 0, %v617
        %v619 = vsel %vm609, %v618, %v617
        %vm620 = vcmp.ne.s32.totalorder %v388, 0
        %vm621 = vcmp.ne.s32.totalorder %v399, 0
        %vm622 = vcmp.ne.s32.totalorder %v410, 0
        %vm623 = vcmp.ne.s32.totalorder %v421, 0
        %vm624 = vcmp.ne.s32.totalorder %v432, 0
        %vm625 = vcmp.ne.s32.totalorder %v443, 0
        %vm626 = vcmp.ne.s32.totalorder %v454, 0
        %vm627 = vcmp.ne.s32.totalorder %v465, 0
        %vm628 = vcmp.ne.s32.totalorder %v476, 0
        %vm629 = vcmp.ne.s32.totalorder %v487, 0
        %vm630 = vcmp.ne.s32.totalorder %v498, 0
        %vm631 = vcmp.ne.s32.totalorder %v509, 0
        %vm632 = vcmp.ne.s32.totalorder %v520, 0
        %vm633 = vcmp.ne.s32.totalorder %v531, 0
        %vm634 = vcmp.ne.s32.totalorder %v542, 0
        %vm635 = vcmp.ne.s32.totalorder %v553, 0
        %vm636 = vcmp.ne.s32.totalorder %v564, 0
        %vm637 = vcmp.ne.s32.totalorder %v575, 0
        %vm638 = vcmp.ne.s32.totalorder %v586, 0
        %vm639 = vcmp.ne.s32.totalorder %v597, 0
        %vm640 = vcmp.ne.s32.totalorder %v608, 0
        %vm641 = vcmp.ne.s32.totalorder %v619, 0
        %vm642 = vcmp.lt.s32.totalorder %v388, 0
        %vm643 = vcmp.lt.s32.totalorder %v399, 0
        %vm644 = vcmp.lt.s32.totalorder %v410, 0
        %vm645 = vcmp.lt.s32.totalorder %v421, 0
        %vm646 = vcmp.lt.s32.totalorder %v432, 0
        %vm647 = vcmp.lt.s32.totalorder %v443, 0
        %vm648 = vcmp.lt.s32.totalorder %v454, 0
        %vm649 = vcmp.lt.s32.totalorder %v465, 0
        %vm650 = vcmp.lt.s32.totalorder %v476, 0
        %vm651 = vcmp.lt.s32.totalorder %v487, 0
        %vm652 = vcmp.lt.s32.totalorder %v498, 0
        %vm653 = vcmp.lt.s32.totalorder %v509, 0
        %vm654 = vcmp.lt.s32.totalorder %v520, 0
        %vm655 = vcmp.lt.s32.totalorder %v531, 0
        %vm656 = vcmp.lt.s32.totalorder %v542, 0
        %vm657 = vcmp.lt.s32.totalorder %v553, 0
        %vm658 = vcmp.lt.s32.totalorder %v564, 0
        %vm659 = vcmp.lt.s32.totalorder %v575, 0
        %vm660 = vcmp.lt.s32.totalorder %v586, 0
        %vm661 = vcmp.lt.s32.totalorder %v597, 0
        %vm662 = vcmp.lt.s32.totalorder %v608, 0
        %vm663 = vcmp.lt.s32.totalorder %v619, 0
        %vm664 = vmand %vm642, %vm620
        %vm665 = vmand %vm643, %vm621
        %vm666 = vmand %vm644, %vm622
        %vm667 = vmand %vm645, %vm623
        %vm668 = vmand %vm646, %vm624
        %vm669 = vmand %vm647, %vm625
        %vm670 = vmand %vm648, %vm626
        %vm671 = vmand %vm649, %vm627
        %vm672 = vmand %vm650, %vm628
        %vm673 = vmand %vm651, %vm629
        %vm674 = vmand %vm652, %vm630
        %vm675 = vmand %vm653, %vm631
        %vm676 = vmand %vm654, %vm632
        %vm677 = vmand %vm655, %vm633
        %vm678 = vmand %vm656, %vm634
        %vm679 = vmand %vm657, %vm635
        %vm680 = vmand %vm658, %vm636
        %vm681 = vmand %vm659, %vm637
        %vm682 = vmand %vm660, %vm638
        %vm683 = vmand %vm661, %vm639
        %vm684 = vmand %vm662, %vm640
        %vm685 = vmand %vm663, %vm641
        %v686 = vadd.s32 %v388, 44
        %v687 = vadd.s32 %v399, 44
        %v688 = vadd.s32 %v410, 44
        %v689 = vadd.s32 %v421, 44
        %v690 = vadd.s32 %v432, 44
        %v691 = vadd.s32 %v443, 44
        %v692 = vadd.s32 %v454, 44
        %v693 = vadd.s32 %v465, 44
        %v694 = vadd.s32 %v476, 44
        %v695 = vadd.s32 %v487, 44
        %v696 = vadd.s32 %v498, 44
        %v697 = vadd.s32 %v509, 44
        %v698 = vadd.s32 %v520, 44
        %v699 = vadd.s32 %v531, 44
        %v700 = vadd.s32 %v542, 44
        %v701 = vadd.s32 %v553, 44
        %v702 = vadd.s32 %v564, 44
        %v703 = vadd.s32 %v575, 44
        %v704 = vadd.s32 %v586, 44
        %v705 = vadd.s32 %v597, 44
        %v706 = vadd.s32 %v608, 44
        %v707 = vadd.s32 %v619, 44
        %v708 = vsel %vm664, %v686, %v388
        %v709 = vsel %vm665, %v687, %v399
        %v710 = vsel %vm666, %v688, %v410
        %v711 = vsel %vm667, %v689, %v421
        %v712 = vsel %vm668, %v690, %v432
        %v713 = vsel %vm669, %v691, %v443
        %v714 = vsel %vm670, %v692, %v454
        %v715 = vsel %vm671, %v693, %v465
        %v716 = vsel %vm672, %v694, %v476
        %v717 = vsel %vm673, %v695, %v487
        %v718 = vsel %vm674, %v696, %v498
        %v719 = vsel %vm675, %v697, %v509
        %v720 = vsel %vm676, %v698, %v520
        %v721 = vsel %vm677, %v699, %v531
        %v722 = vsel %vm678, %v700, %v542
        %v723 = vsel %vm679, %v701, %v553
        %v724 = vsel %vm680, %v702, %v564
        %v725 = vsel %vm681, %v703, %v575
        %v726 = vsel %vm682, %v704, %v586
        %v727 = vsel %vm683, %v705, %v597
        %v728 = vsel %vm684, %v706, %v608
        %v729 = vsel %vm685, %v707, %v619
        %vm730 = vcmp.ge.s32.totalorder %v708, 14
        %vm731 = vcmp.ge.s32.totalorder %v709, 14
        %vm732 = vcmp.ge.s32.totalorder %v710, 14
        %vm733 = vcmp.ge.s32.totalorder %v711, 14
        %vm734 = vcmp.ge.s32.totalorder %v712, 14
        %vm735 = vcmp.ge.s32.totalorder %v713, 14
        %vm736 = vcmp.ge.s32.totalorder %v714, 14
        %vm737 = vcmp.ge.s32.totalorder %v715, 14
        %vm738 = vcmp.ge.s32.totalorder %v716, 14
        %vm739 = vcmp.ge.s32.totalorder %v717, 14
        %vm740 = vcmp.ge.s32.totalorder %v718, 14
        %vm741 = vcmp.ge.s32.totalorder %v719, 14
        %vm742 = vcmp.ge.s32.totalorder %v720, 14
        %vm743 = vcmp.ge.s32.totalorder %v721, 14
        %vm744 = vcmp.ge.s32.totalorder %v722, 14
        %vm745 = vcmp.ge.s32.totalorder %v723, 14
        %vm746 = vcmp.ge.s32.totalorder %v724, 14
        %vm747 = vcmp.ge.s32.totalorder %v725, 14
        %vm748 = vcmp.ge.s32.totalorder %v726, 14
        %vm749 = vcmp.ge.s32.totalorder %v727, 14
        %vm750 = vcmp.ge.s32.totalorder %v728, 14
        %vm751 = vcmp.ge.s32.totalorder %v729, 14
        %vm752 = vcmp.lt.s32.totalorder %v708, 30
        %vm753 = vcmp.lt.s32.totalorder %v709, 30
        %vm754 = vcmp.lt.s32.totalorder %v710, 30
        %vm755 = vcmp.lt.s32.totalorder %v711, 30
        %vm756 = vcmp.lt.s32.totalorder %v712, 30
        %vm757 = vcmp.lt.s32.totalorder %v713, 30
        %vm758 = vcmp.lt.s32.totalorder %v714, 30
        %vm759 = vcmp.lt.s32.totalorder %v715, 30
        %vm760 = vcmp.lt.s32.totalorder %v716, 30
        %vm761 = vcmp.lt.s32.totalorder %v717, 30
        %vm762 = vcmp.lt.s32.totalorder %v718, 30
        %vm763 = vcmp.lt.s32.totalorder %v719, 30
        %vm764 = vcmp.lt.s32.totalorder %v720, 30
        %vm765 = vcmp.lt.s32.totalorder %v721, 30
        %vm766 = vcmp.lt.s32.totalorder %v722, 30
        %vm767 = vcmp.lt.s32.totalorder %v723, 30
        %vm768 = vcmp.lt.s32.totalorder %v724, 30
        %vm769 = vcmp.lt.s32.totalorder %v725, 30
        %vm770 = vcmp.lt.s32.totalorder %v726, 30
        %vm771 = vcmp.lt.s32.totalorder %v727, 30
        %vm772 = vcmp.lt.s32.totalorder %v728, 30
        %vm773 = vcmp.lt.s32.totalorder %v729, 30
        %vm774 = vmand %vm730, %vm752
        %vm775 = vmand %vm731, %vm753
        %vm776 = vmand %vm732, %vm754
        %vm777 = vmand %vm733, %vm755
        %vm778 = vmand %vm734, %vm756
        %vm779 = vmand %vm735, %vm757
        %vm780 = vmand %vm736, %vm758
        %vm781 = vmand %vm737, %vm759
        %vm782 = vmand %vm738, %vm760
        %vm783 = vmand %vm739, %vm761
        %vm784 = vmand %vm740, %vm762
        %vm785 = vmand %vm741, %vm763
        %vm786 = vmand %vm742, %vm764
        %vm787 = vmand %vm743, %vm765
        %vm788 = vmand %vm744, %vm766
        %vm789 = vmand %vm745, %vm767
        %vm790 = vmand %vm746, %vm768
        %vm791 = vmand %vm747, %vm769
        %vm792 = vmand %vm748, %vm770
        %vm793 = vmand %vm749, %vm771
        %vm794 = vmand %vm750, %vm772
        %vm795 = vmand %vm751, %vm773
        %vm796 = vcmp.gt.f32.partialorder %v286, 0.001
        %vm797 = vcmp.gt.f32.partialorder %v287, 0.001
        %vm798 = vcmp.gt.f32.partialorder %v288, 0.001
        %vm799 = vcmp.gt.f32.partialorder %v289, 0.001
        %vm800 = vcmp.gt.f32.partialorder %v290, 0.001
        %vm801 = vcmp.gt.f32.partialorder %v291, 0.001
        %vm802 = vcmp.gt.f32.partialorder %v292, 0.001
        %vm803 = vcmp.gt.f32.partialorder %v293, 0.001
        %vm804 = vcmp.gt.f32.partialorder %v294, 0.001
        %vm805 = vcmp.gt.f32.partialorder %v295, 0.001
        %vm806 = vcmp.gt.f32.partialorder %v296, 0.001
        %vm807 = vcmp.gt.f32.partialorder %v297, 0.001
        %vm808 = vcmp.gt.f32.partialorder %v298, 0.001
        %vm809 = vcmp.gt.f32.partialorder %v299, 0.001
        %vm810 = vcmp.gt.f32.partialorder %v300, 0.001
        %vm811 = vcmp.gt.f32.partialorder %v301, 0.001
        %vm812 = vcmp.gt.f32.partialorder %v302, 0.001
        %vm813 = vcmp.gt.f32.partialorder %v303, 0.001
        %vm814 = vcmp.gt.f32.partialorder %v304, 0.001
        %vm815 = vcmp.gt.f32.partialorder %v305, 0.001
        %vm816 = vcmp.gt.f32.partialorder %v306, 0.001
        %vm817 = vcmp.gt.f32.partialorder %v307, 0.001
        %v818 = vsel %vm774, 1, 0
        %v819 = vsel %vm775, 1, 0
        %v820 = vsel %vm776, 1, 0
        %v821 = vsel %vm777, 1, 0
        %v822 = vsel %vm778, 1, 0
        %v823 = vsel %vm779, 1, 0
        %v824 = vsel %vm780, 1, 0
        %v825 = vsel %vm781, 1, 0
        %v826 = vsel %vm782, 1, 0
        %v827 = vsel %vm783, 1, 0
        %v828 = vsel %vm784, 1, 0
        %v829 = vsel %vm785, 1, 0
        %v830 = vsel %vm786, 1, 0
        %v831 = vsel %vm787, 1, 0
        %v832 = vsel %vm788, 1, 0
        %v833 = vsel %vm789, 1, 0
        %v834 = vsel %vm790, 1, 0
        %v835 = vsel %vm791, 1, 0
        %v836 = vsel %vm792, 1, 0
        %v837 = vsel %vm793, 1, 0
        %v838 = vsel %vm794, 1, 0
        %v839 = vsel %vm795, 1, 0
        %vm840 = vcmp.eq.s32.totalorder %v818, 1
        %vm841 = vcmp.eq.s32.totalorder %v819, 1
        %vm842 = vcmp.eq.s32.totalorder %v820, 1
        %vm843 = vcmp.eq.s32.totalorder %v821, 1
        %vm844 = vcmp.eq.s32.totalorder %v822, 1
        %vm845 = vcmp.eq.s32.totalorder %v823, 1
        %vm846 = vcmp.eq.s32.totalorder %v824, 1
        %vm847 = vcmp.eq.s32.totalorder %v825, 1
        %vm848 = vcmp.eq.s32.totalorder %v826, 1
        %vm849 = vcmp.eq.s32.totalorder %v827, 1
        %vm850 = vcmp.eq.s32.totalorder %v828, 1
        %vm851 = vcmp.eq.s32.totalorder %v829, 1
        %vm852 = vcmp.eq.s32.totalorder %v830, 1
        %vm853 = vcmp.eq.s32.totalorder %v831, 1
        %vm854 = vcmp.eq.s32.totalorder %v832, 1
        %vm855 = vcmp.eq.s32.totalorder %v833, 1
        %vm856 = vcmp.eq.s32.totalorder %v834, 1
        %vm857 = vcmp.eq.s32.totalorder %v835, 1
        %vm858 = vcmp.eq.s32.totalorder %v836, 1
        %vm859 = vcmp.eq.s32.totalorder %v837, 1
        %vm860 = vcmp.eq.s32.totalorder %v838, 1
        %vm861 = vcmp.eq.s32.totalorder %v839, 1
        %vm862 = vmand %vm796, %vm840
        %vm863 = vmand %vm797, %vm841
        %vm864 = vmand %vm798, %vm842
        %vm865 = vmand %vm799, %vm843
        %vm866 = vmand %vm800, %vm844
        %vm867 = vmand %vm801, %vm845
        %vm868 = vmand %vm802, %vm846
        %vm869 = vmand %vm803, %vm847
        %vm870 = vmand %vm804, %vm848
        %vm871 = vmand %vm805, %vm849
        %vm872 = vmand %vm806, %vm850
        %vm873 = vmand %vm807, %vm851
        %vm874 = vmand %vm808, %vm852
        %vm875 = vmand %vm809, %vm853
        %vm876 = vmand %vm810, %vm854
        %vm877 = vmand %vm811, %vm855
        %vm878 = vmand %vm812, %vm856
        %vm879 = vmand %vm813, %vm857
        %vm880 = vmand %vm814, %vm858
        %vm881 = vmand %vm815, %vm859
        %vm882 = vmand %vm816, %vm860
        %vm883 = vmand %vm817, %vm861
        %v884 = vsel %vm862, 1, 0
        %v885 = vsel %vm863, 1, 0
        %v886 = vsel %vm864, 1, 0
        %v887 = vsel %vm865, 1, 0
        %v888 = vsel %vm866, 1, 0
        %v889 = vsel %vm867, 1, 0
        %v890 = vsel %vm868, 1, 0
        %v891 = vsel %vm869, 1, 0
        %v892 = vsel %vm870, 1, 0
        %v893 = vsel %vm871, 1, 0
        %v894 = vsel %vm872, 1, 0
        %v895 = vsel %vm873, 1, 0
        %v896 = vsel %vm874, 1, 0
        %v897 = vsel %vm875, 1, 0
        %v898 = vsel %vm876, 1, 0
        %v899 = vsel %vm877, 1, 0
        %v900 = vsel %vm878, 1, 0
        %v901 = vsel %vm879, 1, 0
        %v902 = vsel %vm880, 1, 0
        %v903 = vsel %vm881, 1, 0
        %v904 = vsel %vm882, 1, 0
        %v905 = vsel %vm883, 1, 0
        %v906 = vcvt.s32.f32 %v884
        %v907 = vcvt.s32.f32 %v885
        %v908 = vcvt.s32.f32 %v886
        %v909 = vcvt.s32.f32 %v887
        %v910 = vcvt.s32.f32 %v888
        %v911 = vcvt.s32.f32 %v889
        %v912 = vcvt.s32.f32 %v890
        %v913 = vcvt.s32.f32 %v891
        %v914 = vcvt.s32.f32 %v892
        %v915 = vcvt.s32.f32 %v893
        %v916 = vcvt.s32.f32 %v894
        %v917 = vcvt.s32.f32 %v895
        %v918 = vcvt.s32.f32 %v896
        %v919 = vcvt.s32.f32 %v897
        %v920 = vcvt.s32.f32 %v898
        %v921 = vcvt.s32.f32 %v899
        %v922 = vcvt.s32.f32 %v900
        %v923 = vcvt.s32.f32 %v901
        %v924 = vcvt.s32.f32 %v902
        %v925 = vcvt.s32.f32 %v903
        %v926 = vcvt.s32.f32 %v904
        %v927 = vcvt.s32.f32 %v905
        %v928 = vsub.f32 %v286, %v308
        %v929 = vsub.f32 %v287, %v309
        %v930 = vsub.f32 %v288, %v310
        %v931 = vsub.f32 %v289, %v311
        %v932 = vsub.f32 %v290, %v312
        %v933 = vsub.f32 %v291, %v313
        %v934 = vsub.f32 %v292, %v314
        %v935 = vsub.f32 %v293, %v315
        %v936 = vsub.f32 %v294, %v316
        %v937 = vsub.f32 %v295, %v317
        %v938 = vsub.f32 %v296, %v318
        %v939 = vsub.f32 %v297, %v319
        %v940 = vsub.f32 %v298, %v320
        %v941 = vsub.f32 %v299, %v321
        %v942 = vsub.f32 %v300, %v322
        %v943 = vsub.f32 %v301, %v323
        %v944 = vsub.f32 %v302, %v324
        %v945 = vsub.f32 %v303, %v325
        %v946 = vsub.f32 %v304, %v326
        %v947 = vsub.f32 %v305, %v327
        %v948 = vsub.f32 %v306, %v328
        %v949 = vsub.f32 %v307, %v329
        %v950 = vmul.f32 %v928, %v906
        %v951 = vmul.f32 %v929, %v907
        %v952 = vmul.f32 %v930, %v908
        %v953 = vmul.f32 %v931, %v909
        %v954 = vmul.f32 %v932, %v910
        %v955 = vmul.f32 %v933, %v911
        %v956 = vmul.f32 %v934, %v912
        %v957 = vmul.f32 %v935, %v913
        %v958 = vmul.f32 %v936, %v914
        %v959 = vmul.f32 %v937, %v915
        %v960 = vmul.f32 %v938, %v916
        %v961 = vmul.f32 %v939, %v917
        %v962 = vmul.f32 %v940, %v918
        %v963 = vmul.f32 %v941, %v919
        %v964 = vmul.f32 %v942, %v920
        %v965 = vmul.f32 %v943, %v921
        %v966 = vmul.f32 %v944, %v922
        %v967 = vmul.f32 %v945, %v923
        %v968 = vmul.f32 %v946, %v924
        %v969 = vmul.f32 %v947, %v925
        %v970 = vmul.f32 %v948, %v926
        %v971 = vmul.f32 %v949, %v927
        %v972 = vmul.f32 %v950, %v950
        %v973 = vmul.f32 %v951, %v951
        %v974 = vmul.f32 %v952, %v952
        %v975 = vmul.f32 %v953, %v953
        %v976 = vmul.f32 %v954, %v954
        %v977 = vmul.f32 %v955, %v955
        %v978 = vmul.f32 %v956, %v956
        %v979 = vmul.f32 %v957, %v957
        %v980 = vmul.f32 %v958, %v958
        %v981 = vmul.f32 %v959, %v959
        %v982 = vmul.f32 %v960, %v960
        %v983 = vmul.f32 %v961, %v961
        %v984 = vmul.f32 %v962, %v962
        %v985 = vmul.f32 %v963, %v963
        %v986 = vmul.f32 %v964, %v964
        %v987 = vmul.f32 %v965, %v965
        %v988 = vmul.f32 %v966, %v966
        %v989 = vmul.f32 %v967, %v967
        %v990 = vmul.f32 %v968, %v968
        %v991 = vmul.f32 %v969, %v969
        %v992 = vmul.f32 %v970, %v970
        %v993 = vmul.f32 %v971, %v971
        %v994 = vld [vmem:[#allocation2] sm:$0xff]
        %vm995 = vcmask 261120
        %v996 = vsel %vm995, %v972, 0.0
        %v997 = vsel %vm995, %v973, 0.0
        %v998 = vadd.f32 %v996, %v997
        %v999 = vsel %vm995, %v974, 0.0
        %v1000 = vadd.f32 %v998, %v999
        %v1001 = vsel %vm995, %v975, 0.0
        %v1002 = vadd.f32 %v1000, %v1001
        %v1003 = vsel %vm995, %v976, 0.0
        %v1004 = vadd.f32 %v1002, %v1003
        %v1005 = vsel %vm995, %v977, 0.0
        %v1006 = vadd.f32 %v1004, %v1005
        %v1007 = vsel %vm995, %v978, 0.0
        %v1008 = vadd.f32 %v1006, %v1007
        %v1009 = vsel %vm995, %v979, 0.0
        %v1010 = vadd.f32 %v1008, %v1009
        %v1011 = vsel %vm995, %v980, 0.0
        %v1012 = vadd.f32 %v1010, %v1011
        %v1013 = vsel %vm995, %v981, 0.0
        %v1014 = vadd.f32 %v1012, %v1013
        %v1015 = vsel %vm995, %v982, 0.0
        %v1016 = vadd.f32 %v1014, %v1015
        %v1017 = vsel %vm995, %v983, 0.0
        %v1018 = vadd.f32 %v1016, %v1017
        %v1019 = vsel %vm995, %v984, 0.0
        %v1020 = vadd.f32 %v1018, %v1019
        %v1021 = vsel %vm995, %v985, 0.0
        %v1022 = vadd.f32 %v1020, %v1021
        %v1023 = vsel %vm995, %v986, 0.0
        %v1024 = vadd.f32 %v1022, %v1023
        %v1025 = vsel %vm995, %v987, 0.0
        %v1026 = vadd.f32 %v1024, %v1025
        %v1027 = vsel %vm995, %v988, 0.0
        %v1028 = vadd.f32 %v1026, %v1027
        %v1029 = vsel %vm995, %v989, 0.0
        %v1030 = vadd.f32 %v1028, %v1029
        %v1031 = vsel %vm995, %v990, 0.0
        %v1032 = vadd.f32 %v1030, %v1031
        %v1033 = vsel %vm995, %v991, 0.0
        %v1034 = vadd.f32 %v1032, %v1033
        %v1035 = vsel %vm995, %v992, 0.0
        %v1036 = vadd.f32 %v1034, %v1035
        %v1037 = vsel %vm995, %v993, 0.0
        %v1038 = vadd.f32 %v1036, %v1037
        %v1039 = vadd.f32 %v994, %v1038
        %1040 = vst.msk [vmem:[#allocation2] sm:$0xff] %vm995, %v1039
        %v1041 = vld [vmem:[#allocation3] sm:$0xff]
        %v1042 = vsel %vm995, %v906, 0.0
        %v1043 = vsel %vm995, %v907, 0.0
        %v1044 = vadd.f32 %v1042, %v1043
        %v1045 = vsel %vm995, %v908, 0.0
        %v1046 = vadd.f32 %v1044, %v1045
        %v1047 = vsel %vm995, %v909, 0.0
        %v1048 = vadd.f32 %v1046, %v1047
        %v1049 = vsel %vm995, %v910, 0.0
        %v1050 = vadd.f32 %v1048, %v1049
        %v1051 = vsel %vm995, %v911, 0.0
        %v1052 = vadd.f32 %v1050, %v1051
        %v1053 = vsel %vm995, %v912, 0.0
        %v1054 = vadd.f32 %v1052, %v1053
        %v1055 = vsel %vm995, %v913, 0.0
        %v1056 = vadd.f32 %v1054, %v1055
        %v1057 = vsel %vm995, %v914, 0.0
        %v1058 = vadd.f32 %v1056, %v1057
        %v1059 = vsel %vm995, %v915, 0.0
        %v1060 = vadd.f32 %v1058, %v1059
        %v1061 = vsel %vm995, %v916, 0.0
        %v1062 = vadd.f32 %v1060, %v1061
        %v1063 = vsel %vm995, %v917, 0.0
        %v1064 = vadd.f32 %v1062, %v1063
        %v1065 = vsel %vm995, %v918, 0.0
        %v1066 = vadd.f32 %v1064, %v1065
        %v1067 = vsel %vm995, %v919, 0.0
        %v1068 = vadd.f32 %v1066, %v1067
        %v1069 = vsel %vm995, %v920, 0.0
        %v1070 = vadd.f32 %v1068, %v1069
        %v1071 = vsel %vm995, %v921, 0.0
        %v1072 = vadd.f32 %v1070, %v1071
        %v1073 = vsel %vm995, %v922, 0.0
        %v1074 = vadd.f32 %v1072, %v1073
        %v1075 = vsel %vm995, %v923, 0.0
        %v1076 = vadd.f32 %v1074, %v1075
        %v1077 = vsel %vm995, %v924, 0.0
        %v1078 = vadd.f32 %v1076, %v1077
        %v1079 = vsel %vm995, %v925, 0.0
        %v1080 = vadd.f32 %v1078, %v1079
        %v1081 = vsel %vm995, %v926, 0.0
        %v1082 = vadd.f32 %v1080, %v1081
        %v1083 = vsel %vm995, %v927, 0.0
        %v1084 = vadd.f32 %v1082, %v1083
        %v1085 = vadd.f32 %v1041, %v1084
        %1086 = vst.msk [vmem:[#allocation3] sm:$0xff] %vm995, %v1085
        // Predicated region
        $region41: #{tpu_custom_call.1} parent=27 // pred_check
          %p1087 = pneg %p279
        $region42: #{tpu_custom_call.1} parent=27 // pred_check_branch
          %1089 = sbr.rel (%p1087) target = $region44
        $region43: #{tpu_custom_call.1} parent=27 // pred_region
          %v1090 = vlaneseq
          %v1091 = vand.u32 %v1090, 127
          %vm1092 = vcmp.ge.s32.totalorder %v1091, 8
          %vm1093 = vcmp.lt.s32.totalorder %v1091, 24
          %vm1094 = vmand %vm1092, %vm1093
          %v1095 = vsel %vm1094, 1, 0
          %v1096 = vcvt.s32.f32 %v1095
          %v1097 = vld [vmem:[#allocation2] sm:$0xff]
          %v1098 = vmul.f32 %v1097, %v1096
          %v1099 = vsel %vm995, %v1098, 0.0
          %1100 = vadd.xlane.f32.xlu0 %v1099
          %v1101 = vpop.xlane.xlu0 %1100
          %v1102 = vrot.slane %v1101, 4
          %v1103 = vadd.f32 %v1101, %v1102
          %v1104 = vrot.slane %v1103, 2
          %v1105 = vadd.f32 %v1103, %v1104
          %v1106 = vrot.slane %v1105, 1
          %v1107 = vadd.f32 %v1105, %v1106
          %s1108 = vtos %v1107
          %v1109 = vstv %s1108
          %vm1110 = vcmask 0
          %1111 = vst.msk [vmem:[%s268] sm:$0x1] %vm1110, %v1109
          %v1112 = vld [vmem:[#allocation3] sm:$0xff]
          %v1113 = vmul.f32 %v1112, %v1096
          %v1114 = vsel %vm995, %v1113, 0.0
          %1115 = vadd.xlane.f32.xlu0 %v1114
          %v1116 = vpop.xlane.xlu0 %1115
          %v1117 = vrot.slane %v1116, 4
          %v1118 = vadd.f32 %v1116, %v1117
          %v1119 = vrot.slane %v1118, 2
          %v1120 = vadd.f32 %v1118, %v1119
          %v1121 = vrot.slane %v1120, 1
          %v1122 = vadd.f32 %v1120, %v1121
          %s1123 = vtos %v1122
          %v1124 = vstv %s1123
          %1125 = vst.msk [vmem:[%s274] sm:$0x1] %vm1110, %v1124
        $region44: #{tpu_custom_call.1} parent=27 // pred_fallthru
          _
        %s1126 = sand.u32 %s116, 1
        %s1127 = scalar_lea.sflag [#allocation6], %s1126
        %s1128 = sand.u32 %s116, 1
        %s1129 = scalar_lea.vmem [#allocation9], %s1128
        %s1130 = sand.u32 %s144, 1
        %s1131 = scalar_lea.sflag [#allocation11], %s1130
        %s1132 = sand.u32 %s144, 1
        %s1133 = scalar_lea.vmem [#allocation10], %s1132
        // Predicated region
        $region45: #{tpu_custom_call.1} parent=27 // pred_check
          %p1134 = pneg %p126
        $region46: #{tpu_custom_call.1} parent=27 // pred_check_branch
          %1136 = sbr.rel (%p1134) target = $region48
        $region47: #{tpu_custom_call.1} parent=27 // pred_region
          %s1138 = ssub.s32 16, 16
          %1139 = vsyncadd %s1127, %s1138
          %s1140 = sadd.s32 %s33, %s32
          %s1141 = smul.addr %s1140, 16
          %s1142 = scalar_lea.hbm %s2, %s1141
          %s1144 = sshll.u32 %s1129, 4
          %s1145 = int_to_ptr.vmem [resolvable:$true] %s1144
          %1147 = dma.vmem_to_hbm [thread:$0]  %s1145, 16, %s1142, %s1127
        $region48: #{tpu_custom_call.1} parent=27 // pred_fallthru
          _
        // Predicated region
        $region49: #{tpu_custom_call.1} parent=27 // pred_check
          %p1148 = pneg %p154
        $region50: #{tpu_custom_call.1} parent=27 // pred_check_branch
          %1150 = sbr.rel (%p1148) target = $region52
        $region51: #{tpu_custom_call.1} parent=27 // pred_region
          %s1152 = ssub.s32 16, 16
          %1153 = vsyncadd %s1131, %s1152
          %s1154 = sadd.s32 %s33, %s32
          %s1155 = smul.addr %s1154, 16
          %s1156 = scalar_lea.hbm %s3, %s1155
          %s1158 = sshll.u32 %s1133, 4
          %s1159 = int_to_ptr.vmem [resolvable:$true] %s1158
          %1161 = dma.vmem_to_hbm [thread:$0]  %s1159, 16, %s1156, %s1131
        $region52: #{tpu_custom_call.1} parent=27 // pred_fallthru
          _
      $region28: #{tpu_custom_call.1} parent=5 // pred_fallthru
        _
      %p1162 = scmp.le.s32.totalorder 2, %s22
      // Predicated region
      $region53: #{tpu_custom_call.1} parent=5 // pred_check
        %p1163 = pneg %p1162
      $region54: #{tpu_custom_call.1} parent=5 // pred_check_branch
        %1165 = sbr.rel (%p1163) target = $region56
      $region55: #{tpu_custom_call.1} parent=5 // pred_region
        %s1166 = ssub.s32 %s22, 2
        // Predicated region
        $region57: #{tpu_custom_call.1} parent=55 // pred_check
          %p1167 = pneg %p132
        $region58: #{tpu_custom_call.1} parent=55 // pred_check_branch
          %1169 = sbr.rel (%p1167) target = $region60
        $region59: #{tpu_custom_call.1} parent=55 // pred_region
          %s1170 = sand.u32 %s117, 1
          %s1171 = scalar_lea.sflag [#allocation6], %s1170
          %s1172 = sand.u32 %s117, 1
          %s1173 = scalar_lea.vmem [#allocation9], %s1172
          %1174 = dma.done %s1171, 16
        $region60: #{tpu_custom_call.1} parent=55 // pred_fallthru
          _
        // Predicated region
        $region61: #{tpu_custom_call.1} parent=55 // pred_check
          %p1175 = pneg %p160
        $region62: #{tpu_custom_call.1} parent=55 // pred_check_branch
          %1177 = sbr.rel (%p1175) target = $region64
        $region63: #{tpu_custom_call.1} parent=55 // pred_region
          %s1178 = sand.u32 %s145, 1
          %s1179 = scalar_lea.sflag [#allocation11], %s1178
          %s1180 = sand.u32 %s145, 1
          %s1181 = scalar_lea.vmem [#allocation10], %s1180
          %1182 = dma.done %s1179, 16
        $region64: #{tpu_custom_call.1} parent=55 // pred_fallthru
          _
      $region56: #{tpu_custom_call.1} parent=5 // pred_fallthru
        _
    $region6: #{tpu_custom_call.1} parent=1 // loop_footer
      %s26 = sadd.s32 1, %s22
    $region7: #{tpu_custom_call.1} parent=1 // loop_footer_branch
      %21 = sbr.rel target = $region3
    $region8: #{tpu_custom_call.1} parent=1 // loop_exit
      _
    %1183 = vsyncpa [#allocation5], 1
    %s1184 = scalar_lea.sflag [#allocation5], 1
    %1185 = vsyncpa %s1184, 1
    %1186 = vsyncpa [#allocation8], 1
    %s1187 = scalar_lea.sflag [#allocation8], 1
    %1188 = vsyncpa %s1187, 1
    %1189 = vsyncpa [#allocation6], 1
    %s1190 = scalar_lea.sflag [#allocation6], 1
    %1191 = vsyncpa %s1190, 1
    %1192 = vsyncpa [#allocation11], 1
    %s1193 = scalar_lea.sflag [#allocation11], 1
    %1194 = vsyncpa %s1193, 1

</llo_original>
